<compile_context>
chip_gen: v7x
topology: tpu7x:2x2x1
jax: 0.10.0
libtpu: 0.0.40
codegen_flags: <defaults>
</compile_context>

<pallas_src>
import functools

import jax
import jax.numpy as jnp
from jax.experimental import pallas as pl
from jax.experimental.pallas import tpu as pltpu

KZ = KX = KY = 3  # GENEO kernel size (z, x, y); odd so 'same' padding is symmetric


def scenenet_kernel(w_ref, lam_ref, x_ref, out_ref, *,
                    C, O, G, Z, XY, fused, bb):
    # w_ref:   SMEM (C*27,) kernel taps, C = O (fused) or G (unfused),
    #          flattened as [(c*KY + dy)*KX + dx]*KZ + dz
    # lam_ref: SMEM (O*G,) relu(lambdas); only read when not fused
    # x_ref:   VMEM (bb, KY*KX, Zp, XY): (dy,dx)-pre-shifted, z-padded, lane-dense
    # out_ref: VMEM (bb, O, Z, XY)
    for b in range(bb):
        accs = [jnp.zeros((Z, XY), jnp.float32) for _ in range(C)]

        # Unrolled shift-and-add 3D conv on the VPU.  Each tap slab is a full-width,
        # lane-offset-0 ref load (dz is a small sublane-offset slice) built once and
        # reused for every channel (tap-outer / channel-inner).
        for t in range(KY * KX):                 # t = dy*KX + dx, pre-shifted copies
            for dz in range(KZ):
                slab = x_ref[b, t, dz:dz + Z, :]          # (Z, XY), aligned lanes
                for c in range(C):
                    w = w_ref[(c * KY * KX + t) * KZ + dz]
                    accs[c] = accs[c] + w * slab

        if fused:
            for o in range(O):
                out_ref[b, o] = jnp.maximum(jnp.tanh(accs[o]), 0.0)
        else:
            # observer convex combination done in-kernel (O > G case)
            for o in range(O):
                comb = jnp.zeros((Z, XY), jnp.float32)
                for g in range(G):
                    comb = comb + lam_ref[o * G + g] * accs[g]
                out_ref[b, o] = jnp.maximum(jnp.tanh(comb), 0.0)


def _pick_batch_block(B, per_item_bytes, vmem_budget=8 << 20):
    """Largest divisor of B giving >=2 grid steps, capped by a VMEM budget."""
    if B <= 1:
        return 1
    cap = max(1, min(B // 2, vmem_budget // max(per_item_bytes, 1)))
    for bb in range(cap, 0, -1):
        if B % bb == 0:
            return bb
    return 1


def scenenet_forward(x, geneo_kernels, lambdas):
    """x: (B, 1, Z, X, Y) f32, geneo_kernels: (G, KZ, KX, KY), lambdas: (O, G)."""
    B, cin, Z, X, Y = x.shape
    assert cin == 1
    G = geneo_kernels.shape[0]
    O = lambdas.shape[0]
    XY = X * Y
    pz, px, py = KZ // 2, KX // 2, KY // 2
    Zp = Z + 2 * pz

    lam_pos = jnp.maximum(lambdas.astype(jnp.float32), 0.0)
    kerns = geneo_kernels.astype(jnp.float32)

    # Fuse the observer combination into per-observer effective kernels only when it
    # reduces MAC count (O <= G); otherwise combine in-kernel.
    fused = O <= G
    if fused:
        W = jnp.einsum("og,gzxy->ozxy", lam_pos, kerns)     # (O, KZ, KX, KY)
        C = O
    else:
        W = kerns                                           # (G, KZ, KX, KY)
        C = G
    # flatten as [c, dy, dx, dz] to match the kernel's tap indexing
    w_flat = jnp.transpose(W, (0, 3, 2, 1)).reshape(-1)
    lam_flat = lam_pos.reshape(-1)

    # Lane-dense, tap-aligned input: 9 (dy,dx)-shifted, z-padded copies, (X,Y)
    # flattened to X*Y lanes.  copy[dy*KX+dx][b, zp, x, y] = xpad[b, zp, x+dx, y+dy].
    xin = x[:, 0].astype(jnp.float32)                              # (B, Z, X, Y)
    xpad = jnp.pad(xin, ((0, 0), (pz, pz), (px, px), (py, py)))    # (B, Zp, X+2, Y+2)
    copies = [xpad[:, :, dx:dx + X, dy:dy + Y]
              for dy in range(KY) for dx in range(KX)]             # each (B, Zp, X, Y)
    x_flat = jnp.stack(copies, axis=1).reshape(B, KY * KX, Zp, XY)

    # Batch blocking: at most 2 grid steps (amortize step overhead, feed both v7x
    # TensorCores), VMEM-capped so double-buffered blocks fit every generation.
    per_item = (KY * KX * Zp * XY + O * Z * XY) * 4
    bb = _pick_batch_block(B, per_item)
    grid_b = B // bb

    kernel = functools.partial(scenenet_kernel, C=C, O=O, G=G, Z=Z, XY=XY,
                               fused=fused, bb=bb)

    out = pl.pallas_call(
        kernel,
        out_shape=jax.ShapeDtypeStruct((B, O, Z, XY), jnp.float32),
        grid_spec=pltpu.PrefetchScalarGridSpec(
            num_scalar_prefetch=2,             # kernel taps + relu(lambdas) -> SMEM
            grid=(grid_b,),
            in_specs=[
                pl.BlockSpec((bb, KY * KX, Zp, XY),
                             lambda b, w, lam: (b, 0, 0, 0)),
            ],
            out_specs=pl.BlockSpec((bb, O, Z, XY),
                                   lambda b, w, lam: (b, 0, 0, 0)),
        ),
        compiler_params=pltpu.CompilerParams(
            dimension_semantics=("parallel",)),  # independent batch blocks -> megacore
    )(w_flat, lam_flat, x_flat)

    return out.reshape(B, O, Z, X, Y)


def scenenet_reference(x, geneo_kernels, lambdas):
    """Pure-JAX reference of the PyTorch forward (unfused, conv-then-combine)."""
    conv = jax.lax.conv_general_dilated(
        x, geneo_kernels[:, None],           # (G, 1, KZ, KX, KY)
        window_strides=(1, 1, 1), padding="SAME",
        dimension_numbers=("NCDHW", "OIDHW", "NCDHW"))
    comb = jnp.einsum("og,bgzxy->bozxy", jnp.maximum(lambdas, 0.0), conv)
    return jnp.maximum(jnp.tanh(comb), 0.0)


if __name__ == "__main__":
    # SceneNet config: geneo_num = {'cy': 2, 'arrow': 1, 'neg': 1}, num_observers = 2
    G = 4          # total number of GENEO layers
    O = 2          # num_observers
    B, Z, X, Y = 2, 8, 16, 16

    key = jax.random.PRNGKey(0)
    k_kern, k_lam, k_x = jax.random.split(key, 3)

    # TODO(synk): true GENEO kernels (cylinder/arrow/neg-sphere parametric
    # discretizations) depend on geometry code not provided; substitute
    # deterministic synthetic kernels of the same shape instead.
    geneo_kernels = jax.random.normal(k_kern, (G, KZ, KX, KY), jnp.float32)

    # lambdas = softmax(rand(num_observers, num_geneos)), as in SceneNet.__init__
    lambdas = jax.nn.softmax(
        jax.random.uniform(k_lam, (O, G), jnp.float32), axis=1)

    x = jax.random.normal(k_x, (B, 1, Z, X, Y), jnp.float32)

    # fused path (O <= G)
    out = scenenet_forward(x, geneo_kernels, lambdas)
    jax.block_until_ready(out)
    ref = scenenet_reference(x, geneo_kernels, lambdas)
    assert out.shape == (B, O, Z, X, Y)
    assert jnp.allclose(out, ref, atol=1e-5, rtol=1e-5), "mismatch vs reference (fused)"

    # unfused path (O > G) exercises the in-kernel observer combination guard
    O_big = 5
    lambdas_big = jax.nn.softmax(
        jax.random.uniform(k_lam, (O_big, G), jnp.float32), axis=1)
    out_big = scenenet_forward(x, geneo_kernels, lambdas_big)
    jax.block_until_ready(out_big)
    ref_big = scenenet_reference(x, geneo_kernels, lambdas_big)
    assert out_big.shape == (B, O_big, Z, X, Y)
    assert jnp.allclose(out_big, ref_big, atol=1e-5, rtol=1e-5), \
        "mismatch vs reference (unfused)"

    print("KERNEL_OK")
</pallas_src>

<mosaic_0001>
module attributes {stable_mosaic.version = 11 : i64} {
  func.func @scenenet_kernel(%arg0: i32, %arg1: memref<54xf32, #tpu.memory_space<smem>>, %arg2: memref<8xf32, #tpu.memory_space<smem>>, %arg3: memref<1x9x10x256xf32, #tpu.memory_space<vmem>>, %arg4: memref<1x2x8x256xf32, #tpu.memory_space<vmem>>) attributes {dimension_semantics = [#tpu.dimension_semantics<parallel>], iteration_bounds = array<i64: 2>, scalar_prefetch = 2 : i64, scratch_operands = 0 : i64, tpu.core_type = #tpu.core_type<tc>, window_params = [{transform_indices = @transform_0, window_bounds = array<i64: 1, 9, 10, 256>}, {transform_indices = @transform_1, window_bounds = array<i64: 1, 2, 8, 256>}]} {
    %cst = arith.constant 0.000000e+00 : f32
    %0 = vector.broadcast %cst : f32 to vector<8x256xf32>
    %cst_0 = arith.constant 0.000000e+00 : f32
    %1 = vector.broadcast %cst_0 : f32 to vector<8x256xf32>
    %c0 = arith.constant 0 : index
    %c0_1 = arith.constant 0 : index
    %c0_2 = arith.constant 0 : index
    %c0_3 = arith.constant 0 : index
    %2 = vector.load %arg3[%c0, %c0_1, %c0_2, %c0_3] : memref<1x9x10x256xf32, #tpu.memory_space<vmem>>, vector<1x1x8x256xf32>
    %3 = vector.shape_cast %2 : vector<1x1x8x256xf32> to vector<8x256xf32>
    %c0_4 = arith.constant 0 : index
    %4 = memref.load %arg1[%c0_4] : memref<54xf32, #tpu.memory_space<smem>>
    %5 = vector.broadcast %4 : f32 to vector<8x256xf32>
    %6 = arith.mulf %5, %3 : vector<8x256xf32>
    %7 = arith.addf %0, %6 : vector<8x256xf32>
    %c27 = arith.constant 27 : index
    %8 = memref.load %arg1[%c27] : memref<54xf32, #tpu.memory_space<smem>>
    %9 = vector.broadcast %8 : f32 to vector<8x256xf32>
    %10 = arith.mulf %9, %3 : vector<8x256xf32>
    %11 = arith.addf %1, %10 : vector<8x256xf32>
    %c0_5 = arith.constant 0 : index
    %c0_6 = arith.constant 0 : index
    %c1 = arith.constant 1 : index
    %c0_7 = arith.constant 0 : index
    %12 = vector.load %arg3[%c0_5, %c0_6, %c1, %c0_7] : memref<1x9x10x256xf32, #tpu.memory_space<vmem>>, vector<1x1x8x256xf32>
    %13 = vector.shape_cast %12 : vector<1x1x8x256xf32> to vector<8x256xf32>
    %c1_8 = arith.constant 1 : index
    %14 = memref.load %arg1[%c1_8] : memref<54xf32, #tpu.memory_space<smem>>
    %15 = vector.broadcast %14 : f32 to vector<8x256xf32>
    %16 = arith.mulf %15, %13 : vector<8x256xf32>
    %17 = arith.addf %7, %16 : vector<8x256xf32>
    %c28 = arith.constant 28 : index
    %18 = memref.load %arg1[%c28] : memref<54xf32, #tpu.memory_space<smem>>
    %19 = vector.broadcast %18 : f32 to vector<8x256xf32>
    %20 = arith.mulf %19, %13 : vector<8x256xf32>
    %21 = arith.addf %11, %20 : vector<8x256xf32>
    %c0_9 = arith.constant 0 : index
    %c0_10 = arith.constant 0 : index
    %c2 = arith.constant 2 : index
    %c0_11 = arith.constant 0 : index
    %22 = vector.load %arg3[%c0_9, %c0_10, %c2, %c0_11] : memref<1x9x10x256xf32, #tpu.memory_space<vmem>>, vector<1x1x8x256xf32>
    %23 = vector.shape_cast %22 : vector<1x1x8x256xf32> to vector<8x256xf32>
    %c2_12 = arith.constant 2 : index
    %24 = memref.load %arg1[%c2_12] : memref<54xf32, #tpu.memory_space<smem>>
    %25 = vector.broadcast %24 : f32 to vector<8x256xf32>
    %26 = arith.mulf %25, %23 : vector<8x256xf32>
    %27 = arith.addf %17, %26 : vector<8x256xf32>
    %c29 = arith.constant 29 : index
    %28 = memref.load %arg1[%c29] : memref<54xf32, #tpu.memory_space<smem>>
    %29 = vector.broadcast %28 : f32 to vector<8x256xf32>
    %30 = arith.mulf %29, %23 : vector<8x256xf32>
    %31 = arith.addf %21, %30 : vector<8x256xf32>
    %c0_13 = arith.constant 0 : index
    %c1_14 = arith.constant 1 : index
    %c0_15 = arith.constant 0 : index
    %c0_16 = arith.constant 0 : index
    %32 = vector.load %arg3[%c0_13, %c1_14, %c0_15, %c0_16] : memref<1x9x10x256xf32, #tpu.memory_space<vmem>>, vector<1x1x8x256xf32>
    %33 = vector.shape_cast %32 : vector<1x1x8x256xf32> to vector<8x256xf32>
    %c3 = arith.constant 3 : index
    %34 = memref.load %arg1[%c3] : memref<54xf32, #tpu.memory_space<smem>>
    %35 = vector.broadcast %34 : f32 to vector<8x256xf32>
    %36 = arith.mulf %35, %33 : vector<8x256xf32>
    %37 = arith.addf %27, %36 : vector<8x256xf32>
    %c30 = arith.constant 30 : index
    %38 = memref.load %arg1[%c30] : memref<54xf32, #tpu.memory_space<smem>>
    %39 = vector.broadcast %38 : f32 to vector<8x256xf32>
    %40 = arith.mulf %39, %33 : vector<8x256xf32>
    %41 = arith.addf %31, %40 : vector<8x256xf32>
    %c0_17 = arith.constant 0 : index
    %c1_18 = arith.constant 1 : index
    %c1_19 = arith.constant 1 : index
    %c0_20 = arith.constant 0 : index
    %42 = vector.load %arg3[%c0_17, %c1_18, %c1_19, %c0_20] : memref<1x9x10x256xf32, #tpu.memory_space<vmem>>, vector<1x1x8x256xf32>
    %43 = vector.shape_cast %42 : vector<1x1x8x256xf32> to vector<8x256xf32>
    %c4 = arith.constant 4 : index
    %44 = memref.load %arg1[%c4] : memref<54xf32, #tpu.memory_space<smem>>
    %45 = vector.broadcast %44 : f32 to vector<8x256xf32>
    %46 = arith.mulf %45, %43 : vector<8x256xf32>
    %47 = arith.addf %37, %46 : vector<8x256xf32>
    %c31 = arith.constant 31 : index
    %48 = memref.load %arg1[%c31] : memref<54xf32, #tpu.memory_space<smem>>
    %49 = vector.broadcast %48 : f32 to vector<8x256xf32>
    %50 = arith.mulf %49, %43 : vector<8x256xf32>
    %51 = arith.addf %41, %50 : vector<8x256xf32>
    %c0_21 = arith.constant 0 : index
    %c1_22 = arith.constant 1 : index
    %c2_23 = arith.constant 2 : index
    %c0_24 = arith.constant 0 : index
    %52 = vector.load %arg3[%c0_21, %c1_22, %c2_23, %c0_24] : memref<1x9x10x256xf32, #tpu.memory_space<vmem>>, vector<1x1x8x256xf32>
    %53 = vector.shape_cast %52 : vector<1x1x8x256xf32> to vector<8x256xf32>
    %c5 = arith.constant 5 : index
    %54 = memref.load %arg1[%c5] : memref<54xf32, #tpu.memory_space<smem>>
    %55 = vector.broadcast %54 : f32 to vector<8x256xf32>
    %56 = arith.mulf %55, %53 : vector<8x256xf32>
    %57 = arith.addf %47, %56 : vector<8x256xf32>
    %c32 = arith.constant 32 : index
    %58 = memref.load %arg1[%c32] : memref<54xf32, #tpu.memory_space<smem>>
    %59 = vector.broadcast %58 : f32 to vector<8x256xf32>
    %60 = arith.mulf %59, %53 : vector<8x256xf32>
    %61 = arith.addf %51, %60 : vector<8x256xf32>
    %c0_25 = arith.constant 0 : index
    %c2_26 = arith.constant 2 : index
    %c0_27 = arith.constant 0 : index
    %c0_28 = arith.constant 0 : index
    %62 = vector.load %arg3[%c0_25, %c2_26, %c0_27, %c0_28] : memref<1x9x10x256xf32, #tpu.memory_space<vmem>>, vector<1x1x8x256xf32>
    %63 = vector.shape_cast %62 : vector<1x1x8x256xf32> to vector<8x256xf32>
    %c6 = arith.constant 6 : index
    %64 = memref.load %arg1[%c6] : memref<54xf32, #tpu.memory_space<smem>>
    %65 = vector.broadcast %64 : f32 to vector<8x256xf32>
    %66 = arith.mulf %65, %63 : vector<8x256xf32>
    %67 = arith.addf %57, %66 : vector<8x256xf32>
    %c33 = arith.constant 33 : index
    %68 = memref.load %arg1[%c33] : memref<54xf32, #tpu.memory_space<smem>>
    %69 = vector.broadcast %68 : f32 to vector<8x256xf32>
    %70 = arith.mulf %69, %63 : vector<8x256xf32>
    %71 = arith.addf %61, %70 : vector<8x256xf32>
    %c0_29 = arith.constant 0 : index
    %c2_30 = arith.constant 2 : index
    %c1_31 = arith.constant 1 : index
    %c0_32 = arith.constant 0 : index
    %72 = vector.load %arg3[%c0_29, %c2_30, %c1_31, %c0_32] : memref<1x9x10x256xf32, #tpu.memory_space<vmem>>, vector<1x1x8x256xf32>
    %73 = vector.shape_cast %72 : vector<1x1x8x256xf32> to vector<8x256xf32>
    %c7 = arith.constant 7 : index
    %74 = memref.load %arg1[%c7] : memref<54xf32, #tpu.memory_space<smem>>
    %75 = vector.broadcast %74 : f32 to vector<8x256xf32>
    %76 = arith.mulf %75, %73 : vector<8x256xf32>
    %77 = arith.addf %67, %76 : vector<8x256xf32>
    %c34 = arith.constant 34 : index
    %78 = memref.load %arg1[%c34] : memref<54xf32, #tpu.memory_space<smem>>
    %79 = vector.broadcast %78 : f32 to vector<8x256xf32>
    %80 = arith.mulf %79, %73 : vector<8x256xf32>
    %81 = arith.addf %71, %80 : vector<8x256xf32>
    %c0_33 = arith.constant 0 : index
    %c2_34 = arith.constant 2 : index
    %c2_35 = arith.constant 2 : index
    %c0_36 = arith.constant 0 : index
    %82 = vector.load %arg3[%c0_33, %c2_34, %c2_35, %c0_36] : memref<1x9x10x256xf32, #tpu.memory_space<vmem>>, vector<1x1x8x256xf32>
    %83 = vector.shape_cast %82 : vector<1x1x8x256xf32> to vector<8x256xf32>
    %c8 = arith.constant 8 : index
    %84 = memref.load %arg1[%c8] : memref<54xf32, #tpu.memory_space<smem>>
    %85 = vector.broadcast %84 : f32 to vector<8x256xf32>
    %86 = arith.mulf %85, %83 : vector<8x256xf32>
    %87 = arith.addf %77, %86 : vector<8x256xf32>
    %c35 = arith.constant 35 : index
    %88 = memref.load %arg1[%c35] : memref<54xf32, #tpu.memory_space<smem>>
    %89 = vector.broadcast %88 : f32 to vector<8x256xf32>
    %90 = arith.mulf %89, %83 : vector<8x256xf32>
    %91 = arith.addf %81, %90 : vector<8x256xf32>
    %c0_37 = arith.constant 0 : index
    %c3_38 = arith.constant 3 : index
    %c0_39 = arith.constant 0 : index
    %c0_40 = arith.constant 0 : index
    %92 = vector.load %arg3[%c0_37, %c3_38, %c0_39, %c0_40] : memref<1x9x10x256xf32, #tpu.memory_space<vmem>>, vector<1x1x8x256xf32>
    %93 = vector.shape_cast %92 : vector<1x1x8x256xf32> to vector<8x256xf32>
    %c9 = arith.constant 9 : index
    %94 = memref.load %arg1[%c9] : memref<54xf32, #tpu.memory_space<smem>>
    %95 = vector.broadcast %94 : f32 to vector<8x256xf32>
    %96 = arith.mulf %95, %93 : vector<8x256xf32>
    %97 = arith.addf %87, %96 : vector<8x256xf32>
    %c36 = arith.constant 36 : index
    %98 = memref.load %arg1[%c36] : memref<54xf32, #tpu.memory_space<smem>>
    %99 = vector.broadcast %98 : f32 to vector<8x256xf32>
    %100 = arith.mulf %99, %93 : vector<8x256xf32>
    %101 = arith.addf %91, %100 : vector<8x256xf32>
    %c0_41 = arith.constant 0 : index
    %c3_42 = arith.constant 3 : index
    %c1_43 = arith.constant 1 : index
    %c0_44 = arith.constant 0 : index
    %102 = vector.load %arg3[%c0_41, %c3_42, %c1_43, %c0_44] : memref<1x9x10x256xf32, #tpu.memory_space<vmem>>, vector<1x1x8x256xf32>
    %103 = vector.shape_cast %102 : vector<1x1x8x256xf32> to vector<8x256xf32>
    %c10 = arith.constant 10 : index
    %104 = memref.load %arg1[%c10] : memref<54xf32, #tpu.memory_space<smem>>
    %105 = vector.broadcast %104 : f32 to vector<8x256xf32>
    %106 = arith.mulf %105, %103 : vector<8x256xf32>
    %107 = arith.addf %97, %106 : vector<8x256xf32>
    %c37 = arith.constant 37 : index
    %108 = memref.load %arg1[%c37] : memref<54xf32, #tpu.memory_space<smem>>
    %109 = vector.broadcast %108 : f32 to vector<8x256xf32>
    %110 = arith.mulf %109, %103 : vector<8x256xf32>
    %111 = arith.addf %101, %110 : vector<8x256xf32>
    %c0_45 = arith.constant 0 : index
    %c3_46 = arith.constant 3 : index
    %c2_47 = arith.constant 2 : index
    %c0_48 = arith.constant 0 : index
    %112 = vector.load %arg3[%c0_45, %c3_46, %c2_47, %c0_48] : memref<1x9x10x256xf32, #tpu.memory_space<vmem>>, vector<1x1x8x256xf32>
    %113 = vector.shape_cast %112 : vector<1x1x8x256xf32> to vector<8x256xf32>
    %c11 = arith.constant 11 : index
    %114 = memref.load %arg1[%c11] : memref<54xf32, #tpu.memory_space<smem>>
    %115 = vector.broadcast %114 : f32 to vector<8x256xf32>
    %116 = arith.mulf %115, %113 : vector<8x256xf32>
    %117 = arith.addf %107, %116 : vector<8x256xf32>
    %c38 = arith.constant 38 : index
    %118 = memref.load %arg1[%c38] : memref<54xf32, #tpu.memory_space<smem>>
    %119 = vector.broadcast %118 : f32 to vector<8x256xf32>
    %120 = arith.mulf %119, %113 : vector<8x256xf32>
    %121 = arith.addf %111, %120 : vector<8x256xf32>
    %c0_49 = arith.constant 0 : index
    %c4_50 = arith.constant 4 : index
    %c0_51 = arith.constant 0 : index
    %c0_52 = arith.constant 0 : index
    %122 = vector.load %arg3[%c0_49, %c4_50, %c0_51, %c0_52] : memref<1x9x10x256xf32, #tpu.memory_space<vmem>>, vector<1x1x8x256xf32>
    %123 = vector.shape_cast %122 : vector<1x1x8x256xf32> to vector<8x256xf32>
    %c12 = arith.constant 12 : index
    %124 = memref.load %arg1[%c12] : memref<54xf32, #tpu.memory_space<smem>>
    %125 = vector.broadcast %124 : f32 to vector<8x256xf32>
    %126 = arith.mulf %125, %123 : vector<8x256xf32>
    %127 = arith.addf %117, %126 : vector<8x256xf32>
    %c39 = arith.constant 39 : index
    %128 = memref.load %arg1[%c39] : memref<54xf32, #tpu.memory_space<smem>>
    %129 = vector.broadcast %128 : f32 to vector<8x256xf32>
    %130 = arith.mulf %129, %123 : vector<8x256xf32>
    %131 = arith.addf %121, %130 : vector<8x256xf32>
    %c0_53 = arith.constant 0 : index
    %c4_54 = arith.constant 4 : index
    %c1_55 = arith.constant 1 : index
    %c0_56 = arith.constant 0 : index
    %132 = vector.load %arg3[%c0_53, %c4_54, %c1_55, %c0_56] : memref<1x9x10x256xf32, #tpu.memory_space<vmem>>, vector<1x1x8x256xf32>
    %133 = vector.shape_cast %132 : vector<1x1x8x256xf32> to vector<8x256xf32>
    %c13 = arith.constant 13 : index
    %134 = memref.load %arg1[%c13] : memref<54xf32, #tpu.memory_space<smem>>
    %135 = vector.broadcast %134 : f32 to vector<8x256xf32>
    %136 = arith.mulf %135, %133 : vector<8x256xf32>
    %137 = arith.addf %127, %136 : vector<8x256xf32>
    %c40 = arith.constant 40 : index
    %138 = memref.load %arg1[%c40] : memref<54xf32, #tpu.memory_space<smem>>
    %139 = vector.broadcast %138 : f32 to vector<8x256xf32>
    %140 = arith.mulf %139, %133 : vector<8x256xf32>
    %141 = arith.addf %131, %140 : vector<8x256xf32>
    %c0_57 = arith.constant 0 : index
    %c4_58 = arith.constant 4 : index
    %c2_59 = arith.constant 2 : index
    %c0_60 = arith.constant 0 : index
    %142 = vector.load %arg3[%c0_57, %c4_58, %c2_59, %c0_60] : memref<1x9x10x256xf32, #tpu.memory_space<vmem>>, vector<1x1x8x256xf32>
    %143 = vector.shape_cast %142 : vector<1x1x8x256xf32> to vector<8x256xf32>
    %c14 = arith.constant 14 : index
    %144 = memref.load %arg1[%c14] : memref<54xf32, #tpu.memory_space<smem>>
    %145 = vector.broadcast %144 : f32 to vector<8x256xf32>
    %146 = arith.mulf %145, %143 : vector<8x256xf32>
    %147 = arith.addf %137, %146 : vector<8x256xf32>
    %c41 = arith.constant 41 : index
    %148 = memref.load %arg1[%c41] : memref<54xf32, #tpu.memory_space<smem>>
    %149 = vector.broadcast %148 : f32 to vector<8x256xf32>
    %150 = arith.mulf %149, %143 : vector<8x256xf32>
    %151 = arith.addf %141, %150 : vector<8x256xf32>
    %c0_61 = arith.constant 0 : index
    %c5_62 = arith.constant 5 : index
    %c0_63 = arith.constant 0 : index
    %c0_64 = arith.constant 0 : index
    %152 = vector.load %arg3[%c0_61, %c5_62, %c0_63, %c0_64] : memref<1x9x10x256xf32, #tpu.memory_space<vmem>>, vector<1x1x8x256xf32>
    %153 = vector.shape_cast %152 : vector<1x1x8x256xf32> to vector<8x256xf32>
    %c15 = arith.constant 15 : index
    %154 = memref.load %arg1[%c15] : memref<54xf32, #tpu.memory_space<smem>>
    %155 = vector.broadcast %154 : f32 to vector<8x256xf32>
    %156 = arith.mulf %155, %153 : vector<8x256xf32>
    %157 = arith.addf %147, %156 : vector<8x256xf32>
    %c42 = arith.constant 42 : index
    %158 = memref.load %arg1[%c42] : memref<54xf32, #tpu.memory_space<smem>>
    %159 = vector.broadcast %158 : f32 to vector<8x256xf32>
    %160 = arith.mulf %159, %153 : vector<8x256xf32>
    %161 = arith.addf %151, %160 : vector<8x256xf32>
    %c0_65 = arith.constant 0 : index
    %c5_66 = arith.constant 5 : index
    %c1_67 = arith.constant 1 : index
    %c0_68 = arith.constant 0 : index
    %162 = vector.load %arg3[%c0_65, %c5_66, %c1_67, %c0_68] : memref<1x9x10x256xf32, #tpu.memory_space<vmem>>, vector<1x1x8x256xf32>
    %163 = vector.shape_cast %162 : vector<1x1x8x256xf32> to vector<8x256xf32>
    %c16 = arith.constant 16 : index
    %164 = memref.load %arg1[%c16] : memref<54xf32, #tpu.memory_space<smem>>
    %165 = vector.broadcast %164 : f32 to vector<8x256xf32>
    %166 = arith.mulf %165, %163 : vector<8x256xf32>
    %167 = arith.addf %157, %166 : vector<8x256xf32>
    %c43 = arith.constant 43 : index
    %168 = memref.load %arg1[%c43] : memref<54xf32, #tpu.memory_space<smem>>
    %169 = vector.broadcast %168 : f32 to vector<8x256xf32>
    %170 = arith.mulf %169, %163 : vector<8x256xf32>
    %171 = arith.addf %161, %170 : vector<8x256xf32>
    %c0_69 = arith.constant 0 : index
    %c5_70 = arith.constant 5 : index
    %c2_71 = arith.constant 2 : index
    %c0_72 = arith.constant 0 : index
    %172 = vector.load %arg3[%c0_69, %c5_70, %c2_71, %c0_72] : memref<1x9x10x256xf32, #tpu.memory_space<vmem>>, vector<1x1x8x256xf32>
    %173 = vector.shape_cast %172 : vector<1x1x8x256xf32> to vector<8x256xf32>
    %c17 = arith.constant 17 : index
    %174 = memref.load %arg1[%c17] : memref<54xf32, #tpu.memory_space<smem>>
    %175 = vector.broadcast %174 : f32 to vector<8x256xf32>
    %176 = arith.mulf %175, %173 : vector<8x256xf32>
    %177 = arith.addf %167, %176 : vector<8x256xf32>
    %c44 = arith.constant 44 : index
    %178 = memref.load %arg1[%c44] : memref<54xf32, #tpu.memory_space<smem>>
    %179 = vector.broadcast %178 : f32 to vector<8x256xf32>
    %180 = arith.mulf %179, %173 : vector<8x256xf32>
    %181 = arith.addf %171, %180 : vector<8x256xf32>
    %c0_73 = arith.constant 0 : index
    %c6_74 = arith.constant 6 : index
    %c0_75 = arith.constant 0 : index
    %c0_76 = arith.constant 0 : index
    %182 = vector.load %arg3[%c0_73, %c6_74, %c0_75, %c0_76] : memref<1x9x10x256xf32, #tpu.memory_space<vmem>>, vector<1x1x8x256xf32>
    %183 = vector.shape_cast %182 : vector<1x1x8x256xf32> to vector<8x256xf32>
    %c18 = arith.constant 18 : index
    %184 = memref.load %arg1[%c18] : memref<54xf32, #tpu.memory_space<smem>>
    %185 = vector.broadcast %184 : f32 to vector<8x256xf32>
    %186 = arith.mulf %185, %183 : vector<8x256xf32>
    %187 = arith.addf %177, %186 : vector<8x256xf32>
    %c45 = arith.constant 45 : index
    %188 = memref.load %arg1[%c45] : memref<54xf32, #tpu.memory_space<smem>>
    %189 = vector.broadcast %188 : f32 to vector<8x256xf32>
    %190 = arith.mulf %189, %183 : vector<8x256xf32>
    %191 = arith.addf %181, %190 : vector<8x256xf32>
    %c0_77 = arith.constant 0 : index
    %c6_78 = arith.constant 6 : index
    %c1_79 = arith.constant 1 : index
    %c0_80 = arith.constant 0 : index
    %192 = vector.load %arg3[%c0_77, %c6_78, %c1_79, %c0_80] : memref<1x9x10x256xf32, #tpu.memory_space<vmem>>, vector<1x1x8x256xf32>
    %193 = vector.shape_cast %192 : vector<1x1x8x256xf32> to vector<8x256xf32>
    %c19 = arith.constant 19 : index
    %194 = memref.load %arg1[%c19] : memref<54xf32, #tpu.memory_space<smem>>
    %195 = vector.broadcast %194 : f32 to vector<8x256xf32>
    %196 = arith.mulf %195, %193 : vector<8x256xf32>
    %197 = arith.addf %187, %196 : vector<8x256xf32>
    %c46 = arith.constant 46 : index
    %198 = memref.load %arg1[%c46] : memref<54xf32, #tpu.memory_space<smem>>
    %199 = vector.broadcast %198 : f32 to vector<8x256xf32>
    %200 = arith.mulf %199, %193 : vector<8x256xf32>
    %201 = arith.addf %191, %200 : vector<8x256xf32>
    %c0_81 = arith.constant 0 : index
    %c6_82 = arith.constant 6 : index
    %c2_83 = arith.constant 2 : index
    %c0_84 = arith.constant 0 : index
    %202 = vector.load %arg3[%c0_81, %c6_82, %c2_83, %c0_84] : memref<1x9x10x256xf32, #tpu.memory_space<vmem>>, vector<1x1x8x256xf32>
    %203 = vector.shape_cast %202 : vector<1x1x8x256xf32> to vector<8x256xf32>
    %c20 = arith.constant 20 : index
    %204 = memref.load %arg1[%c20] : memref<54xf32, #tpu.memory_space<smem>>
    %205 = vector.broadcast %204 : f32 to vector<8x256xf32>
    %206 = arith.mulf %205, %203 : vector<8x256xf32>
    %207 = arith.addf %197, %206 : vector<8x256xf32>
    %c47 = arith.constant 47 : index
    %208 = memref.load %arg1[%c47] : memref<54xf32, #tpu.memory_space<smem>>
    %209 = vector.broadcast %208 : f32 to vector<8x256xf32>
    %210 = arith.mulf %209, %203 : vector<8x256xf32>
    %211 = arith.addf %201, %210 : vector<8x256xf32>
    %c0_85 = arith.constant 0 : index
    %c7_86 = arith.constant 7 : index
    %c0_87 = arith.constant 0 : index
    %c0_88 = arith.constant 0 : index
    %212 = vector.load %arg3[%c0_85, %c7_86, %c0_87, %c0_88] : memref<1x9x10x256xf32, #tpu.memory_space<vmem>>, vector<1x1x8x256xf32>
    %213 = vector.shape_cast %212 : vector<1x1x8x256xf32> to vector<8x256xf32>
    %c21 = arith.constant 21 : index
    %214 = memref.load %arg1[%c21] : memref<54xf32, #tpu.memory_space<smem>>
    %215 = vector.broadcast %214 : f32 to vector<8x256xf32>
    %216 = arith.mulf %215, %213 : vector<8x256xf32>
    %217 = arith.addf %207, %216 : vector<8x256xf32>
    %c48 = arith.constant 48 : index
    %218 = memref.load %arg1[%c48] : memref<54xf32, #tpu.memory_space<smem>>
    %219 = vector.broadcast %218 : f32 to vector<8x256xf32>
    %220 = arith.mulf %219, %213 : vector<8x256xf32>
    %221 = arith.addf %211, %220 : vector<8x256xf32>
    %c0_89 = arith.constant 0 : index
    %c7_90 = arith.constant 7 : index
    %c1_91 = arith.constant 1 : index
    %c0_92 = arith.constant 0 : index
    %222 = vector.load %arg3[%c0_89, %c7_90, %c1_91, %c0_92] : memref<1x9x10x256xf32, #tpu.memory_space<vmem>>, vector<1x1x8x256xf32>
    %223 = vector.shape_cast %222 : vector<1x1x8x256xf32> to vector<8x256xf32>
    %c22 = arith.constant 22 : index
    %224 = memref.load %arg1[%c22] : memref<54xf32, #tpu.memory_space<smem>>
    %225 = vector.broadcast %224 : f32 to vector<8x256xf32>
    %226 = arith.mulf %225, %223 : vector<8x256xf32>
    %227 = arith.addf %217, %226 : vector<8x256xf32>
    %c49 = arith.constant 49 : index
    %228 = memref.load %arg1[%c49] : memref<54xf32, #tpu.memory_space<smem>>
    %229 = vector.broadcast %228 : f32 to vector<8x256xf32>
    %230 = arith.mulf %229, %223 : vector<8x256xf32>
    %231 = arith.addf %221, %230 : vector<8x256xf32>
    %c0_93 = arith.constant 0 : index
    %c7_94 = arith.constant 7 : index
    %c2_95 = arith.constant 2 : index
    %c0_96 = arith.constant 0 : index
    %232 = vector.load %arg3[%c0_93, %c7_94, %c2_95, %c0_96] : memref<1x9x10x256xf32, #tpu.memory_space<vmem>>, vector<1x1x8x256xf32>
    %233 = vector.shape_cast %232 : vector<1x1x8x256xf32> to vector<8x256xf32>
    %c23 = arith.constant 23 : index
    %234 = memref.load %arg1[%c23] : memref<54xf32, #tpu.memory_space<smem>>
    %235 = vector.broadcast %234 : f32 to vector<8x256xf32>
    %236 = arith.mulf %235, %233 : vector<8x256xf32>
    %237 = arith.addf %227, %236 : vector<8x256xf32>
    %c50 = arith.constant 50 : index
    %238 = memref.load %arg1[%c50] : memref<54xf32, #tpu.memory_space<smem>>
    %239 = vector.broadcast %238 : f32 to vector<8x256xf32>
    %240 = arith.mulf %239, %233 : vector<8x256xf32>
    %241 = arith.addf %231, %240 : vector<8x256xf32>
    %c0_97 = arith.constant 0 : index
    %c8_98 = arith.constant 8 : index
    %c0_99 = arith.constant 0 : index
    %c0_100 = arith.constant 0 : index
    %242 = vector.load %arg3[%c0_97, %c8_98, %c0_99, %c0_100] : memref<1x9x10x256xf32, #tpu.memory_space<vmem>>, vector<1x1x8x256xf32>
    %243 = vector.shape_cast %242 : vector<1x1x8x256xf32> to vector<8x256xf32>
    %c24 = arith.constant 24 : index
    %244 = memref.load %arg1[%c24] : memref<54xf32, #tpu.memory_space<smem>>
    %245 = vector.broadcast %244 : f32 to vector<8x256xf32>
    %246 = arith.mulf %245, %243 : vector<8x256xf32>
    %247 = arith.addf %237, %246 : vector<8x256xf32>
    %c51 = arith.constant 51 : index
    %248 = memref.load %arg1[%c51] : memref<54xf32, #tpu.memory_space<smem>>
    %249 = vector.broadcast %248 : f32 to vector<8x256xf32>
    %250 = arith.mulf %249, %243 : vector<8x256xf32>
    %251 = arith.addf %241, %250 : vector<8x256xf32>
    %c0_101 = arith.constant 0 : index
    %c8_102 = arith.constant 8 : index
    %c1_103 = arith.constant 1 : index
    %c0_104 = arith.constant 0 : index
    %252 = vector.load %arg3[%c0_101, %c8_102, %c1_103, %c0_104] : memref<1x9x10x256xf32, #tpu.memory_space<vmem>>, vector<1x1x8x256xf32>
    %253 = vector.shape_cast %252 : vector<1x1x8x256xf32> to vector<8x256xf32>
    %c25 = arith.constant 25 : index
    %254 = memref.load %arg1[%c25] : memref<54xf32, #tpu.memory_space<smem>>
    %255 = vector.broadcast %254 : f32 to vector<8x256xf32>
    %256 = arith.mulf %255, %253 : vector<8x256xf32>
    %257 = arith.addf %247, %256 : vector<8x256xf32>
    %c52 = arith.constant 52 : index
    %258 = memref.load %arg1[%c52] : memref<54xf32, #tpu.memory_space<smem>>
    %259 = vector.broadcast %258 : f32 to vector<8x256xf32>
    %260 = arith.mulf %259, %253 : vector<8x256xf32>
    %261 = arith.addf %251, %260 : vector<8x256xf32>
    %c0_105 = arith.constant 0 : index
    %c8_106 = arith.constant 8 : index
    %c2_107 = arith.constant 2 : index
    %c0_108 = arith.constant 0 : index
    %262 = vector.load %arg3[%c0_105, %c8_106, %c2_107, %c0_108] : memref<1x9x10x256xf32, #tpu.memory_space<vmem>>, vector<1x1x8x256xf32>
    %263 = vector.shape_cast %262 : vector<1x1x8x256xf32> to vector<8x256xf32>
    %c26 = arith.constant 26 : index
    %264 = memref.load %arg1[%c26] : memref<54xf32, #tpu.memory_space<smem>>
    %265 = vector.broadcast %264 : f32 to vector<8x256xf32>
    %266 = arith.mulf %265, %263 : vector<8x256xf32>
    %267 = arith.addf %257, %266 : vector<8x256xf32>
    %c53 = arith.constant 53 : index
    %268 = memref.load %arg1[%c53] : memref<54xf32, #tpu.memory_space<smem>>
    %269 = vector.broadcast %268 : f32 to vector<8x256xf32>
    %270 = arith.mulf %269, %263 : vector<8x256xf32>
    %271 = arith.addf %261, %270 : vector<8x256xf32>
    %272 = math.tanh %267 : vector<8x256xf32>
    %cst_109 = arith.constant 0.000000e+00 : f32
    %273 = vector.broadcast %cst_109 : f32 to vector<8x256xf32>
    %274 = arith.maximumf %272, %273 : vector<8x256xf32>
    %c0_110 = arith.constant 0 : index
    %c0_111 = arith.constant 0 : index
    %c0_112 = arith.constant 0 : index
    %c0_113 = arith.constant 0 : index
    %275 = vector.load %arg4[%c0_110, %c0_111, %c0_112, %c0_113] : memref<1x2x8x256xf32, #tpu.memory_space<vmem>>, vector<1x1x8x256xf32>
    %276 = vector.shape_cast %275 : vector<1x1x8x256xf32> to vector<8x256xf32>
    %277 = vector.shape_cast %274 : vector<8x256xf32> to vector<1x1x8x256xf32>
    tpu.vector_store %arg4[%c0_110, %c0_111, %c0_112, %c0_113], %277 {strides = array<i32>} : memref<1x2x8x256xf32, #tpu.memory_space<vmem>>, vector<1x1x8x256xf32>,
    %278 = math.tanh %271 : vector<8x256xf32>
    %cst_114 = arith.constant 0.000000e+00 : f32
    %279 = vector.broadcast %cst_114 : f32 to vector<8x256xf32>
    %280 = arith.maximumf %278, %279 : vector<8x256xf32>
    %c0_115 = arith.constant 0 : index
    %c1_116 = arith.constant 1 : index
    %c0_117 = arith.constant 0 : index
    %c0_118 = arith.constant 0 : index
    %281 = vector.load %arg4[%c0_115, %c1_116, %c0_117, %c0_118] : memref<1x2x8x256xf32, #tpu.memory_space<vmem>>, vector<1x1x8x256xf32>
    %282 = vector.shape_cast %281 : vector<1x1x8x256xf32> to vector<8x256xf32>
    %283 = vector.shape_cast %280 : vector<8x256xf32> to vector<1x1x8x256xf32>
    tpu.vector_store %arg4[%c0_115, %c1_116, %c0_117, %c0_118], %283 {strides = array<i32>} : memref<1x2x8x256xf32, #tpu.memory_space<vmem>>, vector<1x1x8x256xf32>,
    return
  }
  func.func @transform_0(%arg0: i32, %arg1: memref<54xf32, #tpu.memory_space<smem>>, %arg2: memref<8xf32, #tpu.memory_space<smem>>) -> (i32, i32, i32, i32) {
    %c0_i32 = arith.constant 0 : i32
    %c0_i32_0 = arith.constant 0 : i32
    %c0_i32_1 = arith.constant 0 : i32
    %c0_i32_2 = arith.constant 0 : i32
    return %arg0, %c0_i32, %c0_i32_0, %c0_i32_1 : i32, i32, i32, i32
  }
  func.func @transform_1(%arg0: i32, %arg1: memref<54xf32, #tpu.memory_space<smem>>, %arg2: memref<8xf32, #tpu.memory_space<smem>>) -> (i32, i32, i32, i32) {
    %c0_i32 = arith.constant 0 : i32
    %c0_i32_0 = arith.constant 0 : i32
    %c0_i32_1 = arith.constant 0 : i32
    %c0_i32_2 = arith.constant 0 : i32
    return %arg0, %c0_i32, %c0_i32_0, %c0_i32_1 : i32, i32, i32, i32
  }
}

</mosaic_0001>

<llo_original>
// kernel: tpu_custom_call.1
$region0: #{tpu_custom_call.1}
  #allocation0 [shape = 'u32[]', space=smem, size = 0x4, offset = 0x4, fixed_abs, tag = 'smem constant byte address 0x4 - core index']
  #allocation1 [shape = 'u32[144,128]{1,0:T(1,128)}', space=vmem, size = 0x12000, scoped, tag = 'internal scratch']
  #allocation2 [shape = 's32[1]{0}', space=sflag, size = 0x4, scoped, tag = 'scoped memory for tpu_custom_call.1']
  #allocation3 [shape = 'u8[512]{0}', space=smem, size = 0x200, scoped, tag = 'prefetched SMEM operand 0']
  #allocation4 [shape = 'u8[512]{0}', space=smem, size = 0x200, scoped, tag = 'prefetched SMEM operand 1']
  %s0 = inlined_call_operand.vmem [shape: f32[54], index: 0, kind: input, shape index: {}]
  %s1 = inlined_call_operand.vmem [shape: f32[8], index: 1, kind: input, shape index: {}]
  %s2 = inlined_call_operand.vmem [shape: f32[2,9,10,256], index: 2, kind: input, shape index: {}]
  %s3 = inlined_call_operand.hbm [shape: f32[2,2,8,256], index: 3, kind: output, shape index: {}]
  %s4 = sld [smem:[#allocation0]]
  $region37: #{tpu_custom_call.1} parent=0
    _
  %s6 = ssub.s32 1, %s4
  %s7 = scalar_select 0, %s6, %s4
  %s8 = sshll.u32 %s0, 4
  %s9 = int_to_ptr.vmem [resolvable:$true] %s8
  %11 = dma.vmem_to_smem %s9, 16, [#allocation3], [#allocation2]
  %s12 = sshll.u32 %s1, 4
  %s13 = int_to_ptr.vmem [resolvable:$true] %s12
  %15 = dma.vmem_to_smem %s13, 16, [#allocation4], [#allocation2]
  %16 = dma.done [#allocation2], 32
  %17 = sfence
  $region1: #{tpu_custom_call.1} parent=0
    #allocation5 [shape = 'u8[32768]{0}', space=vmem, size = 0x8000, scoped, tag = 'output window, operand 0']
    #allocation6 [shape = 's32[2]{0}', space=sflag, size = 0x8, scoped, tag = 'scoped memory for tpu_custom_call.1']
    %18 = vsyncpa [#allocation6], 0
    %s19 = scalar_lea.sflag [#allocation6], 1
    %20 = vsyncpa %s19, 0
    loop: start=0, step=1, limit=4
    $region2: #{tpu_custom_call.1} parent=1 // loop_pre_header
      _
    $region3: #{tpu_custom_call.1} parent=1 // loop_header
      %s22 = sphi 0, %s26
      %p23 = scmp.ge.s32.totalorder %s22, 4
      %s32 = sphi 0, %s34
      %s35 = sphi 0, %s32
      %s36 = sphi 0, %s35
      %s52 = sphi 0, %s36
      %s58 = sphi 0, %s60
      %s61 = sphi 0, %s58
      %s62 = sphi 0, %s61
      %s78 = sphi 0, %s62
    $region4: #{tpu_custom_call.1} parent=1 // loop_header_branch
      %25 = sbr.rel (%p23) target = $region8
    $region5: #{tpu_custom_call.1} parent=1 // loop_body
      %s27 = ssub.s32 %s22, 1
      %s28 = ssub.s32 %s22, 2
      %s29 = sadd.s32 %s22, 1
      %s30 = ssub.s32 %s22, %s29
      %p31 = scmp.eq.s32.totalorder %s30, 0
      %s33 = sadd.s32 %s32, 1
      %s34 = scalar_select %p31, %s32, %s33
      %p37 = pneg %p31
      %p38 = scmp.eq.s32.totalorder %s22, 1
      %p39 = por %p37, %p38
      %p40 = scmp.ne.s32.totalorder %s32, %s35
      %p41 = scmp.eq.s32.totalorder %s22, 0
      %p42 = por %p40, %p41
      %p43 = scmp.ne.s32.totalorder %s32, %s35
      %p44 = scmp.eq.s32.totalorder %s27, 1
      %p45 = por %p43, %p44
      %p46 = scmp.ne.s32.totalorder %s35, %s36
      %p47 = scmp.eq.s32.totalorder %s27, 0
      %p48 = por %p46, %p47
      %p49 = scmp.ne.s32.totalorder %s35, %s36
      %p50 = scmp.eq.s32.totalorder %s28, 1
      %p51 = por %p49, %p50
      %p53 = scmp.ne.s32.totalorder %s36, %s52
      %p54 = scmp.eq.s32.totalorder %s28, 0
      %p55 = por %p53, %p54
      %s56 = ssub.s32 %s22, %s29
      %p57 = scmp.eq.s32.totalorder %s56, 0
      %s59 = sadd.s32 %s58, 1
      %s60 = scalar_select %p57, %s58, %s59
      %p63 = pneg %p57
      %p64 = scmp.eq.s32.totalorder %s22, 1
      %p65 = por %p63, %p64
      %p66 = scmp.ne.s32.totalorder %s58, %s61
      %p67 = scmp.eq.s32.totalorder %s22, 0
      %p68 = por %p66, %p67
      %p69 = scmp.ne.s32.totalorder %s58, %s61
      %p70 = scmp.eq.s32.totalorder %s27, 1
      %p71 = por %p69, %p70
      %p72 = scmp.ne.s32.totalorder %s61, %s62
      %p73 = scmp.eq.s32.totalorder %s27, 0
      %p74 = por %p72, %p73
      %p75 = scmp.ne.s32.totalorder %s61, %s62
      %p76 = scmp.eq.s32.totalorder %s28, 1
      %p77 = por %p75, %p76
      %p79 = scmp.ne.s32.totalorder %s62, %s78
      %p80 = scmp.eq.s32.totalorder %s28, 0
      %p81 = por %p79, %p80
      %p82 = scmp.le.s32.totalorder 1, %s22
      %p83 = scmp.lt.s32.totalorder %s22, 3
      %p84 = pnand %p82, %p83
      %p85 = pneg %p84
      // Predicated region
      $region9: #{tpu_custom_call.1} parent=5 // pred_check
        _
      $region10: #{tpu_custom_call.1} parent=5 // pred_check_branch
        %87 = sbr.rel (%p84) target = $region12
      $region11: #{tpu_custom_call.1} parent=5 // pred_region
        %s88 = ssub.s32 %s22, 1
      $region12: #{tpu_custom_call.1} parent=5 // pred_fallthru
        _
      %p89 = scmp.lt.s32.totalorder %s22, 2
      // Predicated region
      $region13: #{tpu_custom_call.1} parent=5 // pred_check
        %p90 = pneg %p89
      $region14: #{tpu_custom_call.1} parent=5 // pred_check_branch
        %92 = sbr.rel (%p90) target = $region16
      $region15: #{tpu_custom_call.1} parent=5 // pred_region
        // Predicated region
        $region17: #{tpu_custom_call.1} parent=15 // pred_check
          %p93 = pneg %p42
        $region18: #{tpu_custom_call.1} parent=15 // pred_check_branch
          %95 = sbr.rel (%p93) target = $region20
        $region19: #{tpu_custom_call.1} parent=15 // pred_region
          %p96 = scmp.lt.s32.totalorder %s22, 1
          %s97 = scalar_select %p96, %s22, 1
          %s98 = smul.addr %s97, 36
          %s99 = smul.addr %s98, 8
          %s100 = scalar_lea.vmem %s2, %s99
        $region20: #{tpu_custom_call.1} parent=15 // pred_fallthru
          _
      $region16: #{tpu_custom_call.1} parent=5 // pred_fallthru
        _
      %p101 = scmp.le.s32.totalorder 1, %s22
      %p102 = scmp.lt.s32.totalorder %s22, 3
      %p103 = pnand %p101, %p102
      %p104 = pneg %p103
      // Predicated region
      $region21: #{tpu_custom_call.1} parent=5 // pred_check
        _
      $region22: #{tpu_custom_call.1} parent=5 // pred_check_branch
        %106 = sbr.rel (%p103) target = $region24
      $region23: #{tpu_custom_call.1} parent=5 // pred_region
        %s107 = ssub.s32 %s22, 1
        %p108 = scmp.lt.s32.totalorder %s27, 1
        %s109 = scalar_select %p108, %s27, 1
        %s110 = smul.addr %s109, 36
        %s111 = smul.addr %s110, 8
        %s112 = scalar_lea.vmem %s2, %s111
        %p113 = pneg %p48
        %p114 = pneg %p45
        %p115 = pneg %p74
        %p116 = pneg %p71
        %s117 = sand.u32 %s61, 1
        %s118 = scalar_lea.sflag [#allocation6], %s117
        %s119 = sand.u32 %s61, 1
        %s120 = smul.addr %s119, 32
        %s121 = scalar_lea.vmem [#allocation5], %s120
        %p122 = scmp.lt.s32.totalorder %s27, 1
        %s123 = scalar_select %p122, %s27, 1
        %s124 = smul.addr %s123, 36
        %s125 = smul.addr %s124, 8
        %s126 = scalar_lea.vmem %s2, %s125
        %v127 = vld [vmem:[%s126] sm:$0xff]
        %v128 = vld [vmem:[%s126 + $0x8] sm:$0xff]
        %s129 = sld [smem:[#allocation3]]
        %v130 = vstv %s129
        %v131 = vmul.f32 %v130, %v127
        %v132 = vmul.f32 %v130, %v128
        %v133 = vadd.f32 %v131, 0.0
        %v134 = vadd.f32 %v132, 0.0
        %s135 = sld [smem:[#allocation3 + $0x1b]]
        %v136 = vstv %s135
        %v137 = vmul.f32 %v136, %v127
        %v138 = vmul.f32 %v136, %v128
        %v139 = vadd.f32 %v137, 0.0
        %v140 = vadd.f32 %v138, 0.0
        %v141 = vld [vmem:[%s126] sm:$0xfe]
        %v142 = vld [vmem:[%s126 + $0x8] sm:$0xfe]
        %v143 = vld [vmem:[%s126 + $0x10] sm:$0x1]
        %v144 = vld [vmem:[%s126 + $0x18] sm:$0x1]
        %s145 = sld [smem:[#allocation3 + $0x1]]
        %v146 = vstv %s145
        %v147 = vmul.f32 %v146, %v141
        %v148 = vmul.f32 %v146, %v142
        %v149 = vmul.f32 %v146, %v143
        %v150 = vmul.f32 %v146, %v144
        %vm155 = vcmask 1046528
        %v156 = vrot.slane %v147, 1
        %v157 = vrot.slane %v149, 1
        %v158 = vsel %vm155, %v156, %v157
        %v159 = vrot.slane %v148, 1
        %v160 = vrot.slane %v150, 1
        %v161 = vsel %vm155, %v159, %v160
        %v164 = vadd.f32 %v133, %v158
        %v165 = vadd.f32 %v134, %v161
        %s166 = sld [smem:[#allocation3 + $0x1c]]
        %v167 = vstv %s166
        %v168 = vmul.f32 %v167, %v141
        %v169 = vmul.f32 %v167, %v142
        %v170 = vmul.f32 %v167, %v143
        %v171 = vmul.f32 %v167, %v144
        %v176 = vrot.slane %v168, 1
        %v177 = vrot.slane %v170, 1
        %v178 = vsel %vm155, %v176, %v177
        %v179 = vrot.slane %v169, 1
        %v180 = vrot.slane %v171, 1
        %v181 = vsel %vm155, %v179, %v180
        %v184 = vadd.f32 %v139, %v178
        %v185 = vadd.f32 %v140, %v181
        %v186 = vld [vmem:[%s126] sm:$0xfc]
        %v187 = vld [vmem:[%s126 + $0x8] sm:$0xfc]
        %v188 = vld [vmem:[%s126 + $0x10] sm:$0x3]
        %v189 = vld [vmem:[%s126 + $0x18] sm:$0x3]
        %s190 = sld [smem:[#allocation3 + $0x2]]
        %v191 = vstv %s190
        %v192 = vmul.f32 %v191, %v186
        %v193 = vmul.f32 %v191, %v187
        %v194 = vmul.f32 %v191, %v188
        %v195 = vmul.f32 %v191, %v189
        %vm200 = vcmask 1045504
        %v201 = vrot.slane %v192, 2
        %v202 = vrot.slane %v194, 2
        %v203 = vsel %vm200, %v201, %v202
        %v204 = vrot.slane %v193, 2
        %v205 = vrot.slane %v195, 2
        %v206 = vsel %vm200, %v204, %v205
        %v209 = vadd.f32 %v164, %v203
        %v210 = vadd.f32 %v165, %v206
        %s211 = sld [smem:[#allocation3 + $0x1d]]
        %v212 = vstv %s211
        %v213 = vmul.f32 %v212, %v186
        %v214 = vmul.f32 %v212, %v187
        %v215 = vmul.f32 %v212, %v188
        %v216 = vmul.f32 %v212, %v189
        %v221 = vrot.slane %v213, 2
        %v222 = vrot.slane %v215, 2
        %v223 = vsel %vm200, %v221, %v222
        %v224 = vrot.slane %v214, 2
        %v225 = vrot.slane %v216, 2
        %v226 = vsel %vm200, %v224, %v225
        %v229 = vadd.f32 %v184, %v223
        %v230 = vadd.f32 %v185, %v226
        %s231 = scalar_lea.vmem %s126, 32
        %v232 = vld [vmem:[%s231] sm:$0xff]
        %v233 = vld [vmem:[%s231 + $0x8] sm:$0xff]
        %s234 = sld [smem:[#allocation3 + $0x3]]
        %v235 = vstv %s234
        %v236 = vmul.f32 %v235, %v232
        %v237 = vmul.f32 %v235, %v233
        %v238 = vadd.f32 %v209, %v236
        %v239 = vadd.f32 %v210, %v237
        %s240 = sld [smem:[#allocation3 + $0x1e]]
        %v241 = vstv %s240
        %v242 = vmul.f32 %v241, %v232
        %v243 = vmul.f32 %v241, %v233
        %v244 = vadd.f32 %v229, %v242
        %v245 = vadd.f32 %v230, %v243
        %v246 = vld [vmem:[%s231] sm:$0xfe]
        %v247 = vld [vmem:[%s231 + $0x8] sm:$0xfe]
        %v248 = vld [vmem:[%s231 + $0x10] sm:$0x1]
        %v249 = vld [vmem:[%s231 + $0x18] sm:$0x1]
        %s250 = sld [smem:[#allocation3 + $0x4]]
        %v251 = vstv %s250
        %v252 = vmul.f32 %v251, %v246
        %v253 = vmul.f32 %v251, %v247
        %v254 = vmul.f32 %v251, %v248
        %v255 = vmul.f32 %v251, %v249
        %v260 = vrot.slane %v252, 1
        %v261 = vrot.slane %v254, 1
        %v262 = vsel %vm155, %v260, %v261
        %v263 = vrot.slane %v253, 1
        %v264 = vrot.slane %v255, 1
        %v265 = vsel %vm155, %v263, %v264
        %v268 = vadd.f32 %v238, %v262
        %v269 = vadd.f32 %v239, %v265
        %s270 = sld [smem:[#allocation3 + $0x1f]]
        %v271 = vstv %s270
        %v272 = vmul.f32 %v271, %v246
        %v273 = vmul.f32 %v271, %v247
        %v274 = vmul.f32 %v271, %v248
        %v275 = vmul.f32 %v271, %v249
        %v280 = vrot.slane %v272, 1
        %v281 = vrot.slane %v274, 1
        %v282 = vsel %vm155, %v280, %v281
        %v283 = vrot.slane %v273, 1
        %v284 = vrot.slane %v275, 1
        %v285 = vsel %vm155, %v283, %v284
        %v288 = vadd.f32 %v244, %v282
        %v289 = vadd.f32 %v245, %v285
        %v290 = vld [vmem:[%s231] sm:$0xfc]
        %v291 = vld [vmem:[%s231 + $0x8] sm:$0xfc]
        %v292 = vld [vmem:[%s231 + $0x10] sm:$0x3]
        %v293 = vld [vmem:[%s231 + $0x18] sm:$0x3]
        %s294 = sld [smem:[#allocation3 + $0x5]]
        %v295 = vstv %s294
        %v296 = vmul.f32 %v295, %v290
        %v297 = vmul.f32 %v295, %v291
        %v298 = vmul.f32 %v295, %v292
        %v299 = vmul.f32 %v295, %v293
        %v304 = vrot.slane %v296, 2
        %v305 = vrot.slane %v298, 2
        %v306 = vsel %vm200, %v304, %v305
        %v307 = vrot.slane %v297, 2
        %v308 = vrot.slane %v299, 2
        %v309 = vsel %vm200, %v307, %v308
        %v312 = vadd.f32 %v268, %v306
        %v313 = vadd.f32 %v269, %v309
        %s314 = sld [smem:[#allocation3 + $0x20]]
        %v315 = vstv %s314
        %v316 = vmul.f32 %v315, %v290
        %v317 = vmul.f32 %v315, %v291
        %v318 = vmul.f32 %v315, %v292
        %v319 = vmul.f32 %v315, %v293
        %v324 = vrot.slane %v316, 2
        %v325 = vrot.slane %v318, 2
        %v326 = vsel %vm200, %v324, %v325
        %v327 = vrot.slane %v317, 2
        %v328 = vrot.slane %v319, 2
        %v329 = vsel %vm200, %v327, %v328
        %v332 = vadd.f32 %v288, %v326
        %v333 = vadd.f32 %v289, %v329
        %s334 = scalar_lea.vmem %s126, 64
        %v335 = vld [vmem:[%s334] sm:$0xff]
        %v336 = vld [vmem:[%s334 + $0x8] sm:$0xff]
        %s337 = sld [smem:[#allocation3 + $0x6]]
        %v338 = vstv %s337
        %v339 = vmul.f32 %v338, %v335
        %v340 = vmul.f32 %v338, %v336
        %v341 = vadd.f32 %v312, %v339
        %v342 = vadd.f32 %v313, %v340
        %s343 = sld [smem:[#allocation3 + $0x21]]
        %v344 = vstv %s343
        %v345 = vmul.f32 %v344, %v335
        %v346 = vmul.f32 %v344, %v336
        %v347 = vadd.f32 %v332, %v345
        %v348 = vadd.f32 %v333, %v346
        %v349 = vld [vmem:[%s334] sm:$0xfe]
        %v350 = vld [vmem:[%s334 + $0x8] sm:$0xfe]
        %v351 = vld [vmem:[%s334 + $0x10] sm:$0x1]
        %v352 = vld [vmem:[%s334 + $0x18] sm:$0x1]
        %s353 = sld [smem:[#allocation3 + $0x7]]
        %v354 = vstv %s353
        %v355 = vmul.f32 %v354, %v349
        %v356 = vmul.f32 %v354, %v350
        %v357 = vmul.f32 %v354, %v351
        %v358 = vmul.f32 %v354, %v352
        %v363 = vrot.slane %v355, 1
        %v364 = vrot.slane %v357, 1
        %v365 = vsel %vm155, %v363, %v364
        %v366 = vrot.slane %v356, 1
        %v367 = vrot.slane %v358, 1
        %v368 = vsel %vm155, %v366, %v367
        %v371 = vadd.f32 %v341, %v365
        %v372 = vadd.f32 %v342, %v368
        %s373 = sld [smem:[#allocation3 + $0x22]]
        %v374 = vstv %s373
        %v375 = vmul.f32 %v374, %v349
        %v376 = vmul.f32 %v374, %v350
        %v377 = vmul.f32 %v374, %v351
        %v378 = vmul.f32 %v374, %v352
        %v383 = vrot.slane %v375, 1
        %v384 = vrot.slane %v377, 1
        %v385 = vsel %vm155, %v383, %v384
        %v386 = vrot.slane %v376, 1
        %v387 = vrot.slane %v378, 1
        %v388 = vsel %vm155, %v386, %v387
        %v391 = vadd.f32 %v347, %v385
        %v392 = vadd.f32 %v348, %v388
        %v393 = vld [vmem:[%s334] sm:$0xfc]
        %v394 = vld [vmem:[%s334 + $0x8] sm:$0xfc]
        %v395 = vld [vmem:[%s334 + $0x10] sm:$0x3]
        %v396 = vld [vmem:[%s334 + $0x18] sm:$0x3]
        %s397 = sld [smem:[#allocation3 + $0x8]]
        %v398 = vstv %s397
        %v399 = vmul.f32 %v398, %v393
        %v400 = vmul.f32 %v398, %v394
        %v401 = vmul.f32 %v398, %v395
        %v402 = vmul.f32 %v398, %v396
        %v407 = vrot.slane %v399, 2
        %v408 = vrot.slane %v401, 2
        %v409 = vsel %vm200, %v407, %v408
        %v410 = vrot.slane %v400, 2
        %v411 = vrot.slane %v402, 2
        %v412 = vsel %vm200, %v410, %v411
        %v415 = vadd.f32 %v371, %v409
        %v416 = vadd.f32 %v372, %v412
        %s417 = sld [smem:[#allocation3 + $0x23]]
        %v418 = vstv %s417
        %v419 = vmul.f32 %v418, %v393
        %v420 = vmul.f32 %v418, %v394
        %v421 = vmul.f32 %v418, %v395
        %v422 = vmul.f32 %v418, %v396
        %v427 = vrot.slane %v419, 2
        %v428 = vrot.slane %v421, 2
        %v429 = vsel %vm200, %v427, %v428
        %v430 = vrot.slane %v420, 2
        %v431 = vrot.slane %v422, 2
        %v432 = vsel %vm200, %v430, %v431
        %v435 = vadd.f32 %v391, %v429
        %v436 = vadd.f32 %v392, %v432
        %s437 = scalar_lea.vmem %s126, 96
        %v438 = vld [vmem:[%s437] sm:$0xff]
        %v439 = vld [vmem:[%s437 + $0x8] sm:$0xff]
        %s440 = sld [smem:[#allocation3 + $0x9]]
        %v441 = vstv %s440
        %v442 = vmul.f32 %v441, %v438
        %v443 = vmul.f32 %v441, %v439
        %v444 = vadd.f32 %v415, %v442
        %v445 = vadd.f32 %v416, %v443
        %s446 = sld [smem:[#allocation3 + $0x24]]
        %v447 = vstv %s446
        %v448 = vmul.f32 %v447, %v438
        %v449 = vmul.f32 %v447, %v439
        %v450 = vadd.f32 %v435, %v448
        %v451 = vadd.f32 %v436, %v449
        %v452 = vld [vmem:[%s437] sm:$0xfe]
        %v453 = vld [vmem:[%s437 + $0x8] sm:$0xfe]
        %v454 = vld [vmem:[%s437 + $0x10] sm:$0x1]
        %v455 = vld [vmem:[%s437 + $0x18] sm:$0x1]
        %s456 = sld [smem:[#allocation3 + $0xa]]
        %v457 = vstv %s456
        %v458 = vmul.f32 %v457, %v452
        %v459 = vmul.f32 %v457, %v453
        %v460 = vmul.f32 %v457, %v454
        %v461 = vmul.f32 %v457, %v455
        %v466 = vrot.slane %v458, 1
        %v467 = vrot.slane %v460, 1
        %v468 = vsel %vm155, %v466, %v467
        %v469 = vrot.slane %v459, 1
        %v470 = vrot.slane %v461, 1
        %v471 = vsel %vm155, %v469, %v470
        %v474 = vadd.f32 %v444, %v468
        %v475 = vadd.f32 %v445, %v471
        %s476 = sld [smem:[#allocation3 + $0x25]]
        %v477 = vstv %s476
        %v478 = vmul.f32 %v477, %v452
        %v479 = vmul.f32 %v477, %v453
        %v480 = vmul.f32 %v477, %v454
        %v481 = vmul.f32 %v477, %v455
        %v486 = vrot.slane %v478, 1
        %v487 = vrot.slane %v480, 1
        %v488 = vsel %vm155, %v486, %v487
        %v489 = vrot.slane %v479, 1
        %v490 = vrot.slane %v481, 1
        %v491 = vsel %vm155, %v489, %v490
        %v494 = vadd.f32 %v450, %v488
        %v495 = vadd.f32 %v451, %v491
        %v496 = vld [vmem:[%s437] sm:$0xfc]
        %v497 = vld [vmem:[%s437 + $0x8] sm:$0xfc]
        %v498 = vld [vmem:[%s437 + $0x10] sm:$0x3]
        %v499 = vld [vmem:[%s437 + $0x18] sm:$0x3]
        %s500 = sld [smem:[#allocation3 + $0xb]]
        %v501 = vstv %s500
        %v502 = vmul.f32 %v501, %v496
        %v503 = vmul.f32 %v501, %v497
        %v504 = vmul.f32 %v501, %v498
        %v505 = vmul.f32 %v501, %v499
        %v510 = vrot.slane %v502, 2
        %v511 = vrot.slane %v504, 2
        %v512 = vsel %vm200, %v510, %v511
        %v513 = vrot.slane %v503, 2
        %v514 = vrot.slane %v505, 2
        %v515 = vsel %vm200, %v513, %v514
        %v518 = vadd.f32 %v474, %v512
        %v519 = vadd.f32 %v475, %v515
        %s520 = sld [smem:[#allocation3 + $0x26]]
        %v521 = vstv %s520
        %v522 = vmul.f32 %v521, %v496
        %v523 = vmul.f32 %v521, %v497
        %v524 = vmul.f32 %v521, %v498
        %v525 = vmul.f32 %v521, %v499
        %v530 = vrot.slane %v522, 2
        %v531 = vrot.slane %v524, 2
        %v532 = vsel %vm200, %v530, %v531
        %v533 = vrot.slane %v523, 2
        %v534 = vrot.slane %v525, 2
        %v535 = vsel %vm200, %v533, %v534
        %v538 = vadd.f32 %v494, %v532
        %v539 = vadd.f32 %v495, %v535
        %s540 = scalar_lea.vmem %s126, 128
        %v541 = vld [vmem:[%s540] sm:$0xff]
        %v542 = vld [vmem:[%s540 + $0x8] sm:$0xff]
        %s543 = sld [smem:[#allocation3 + $0xc]]
        %v544 = vstv %s543
        %v545 = vmul.f32 %v544, %v541
        %v546 = vmul.f32 %v544, %v542
        %v547 = vadd.f32 %v518, %v545
        %v548 = vadd.f32 %v519, %v546
        %s549 = sld [smem:[#allocation3 + $0x27]]
        %v550 = vstv %s549
        %v551 = vmul.f32 %v550, %v541
        %v552 = vmul.f32 %v550, %v542
        %v553 = vadd.f32 %v538, %v551
        %v554 = vadd.f32 %v539, %v552
        %v555 = vld [vmem:[%s540] sm:$0xfe]
        %v556 = vld [vmem:[%s540 + $0x8] sm:$0xfe]
        %v557 = vld [vmem:[%s540 + $0x10] sm:$0x1]
        %v558 = vld [vmem:[%s540 + $0x18] sm:$0x1]
        %s559 = sld [smem:[#allocation3 + $0xd]]
        %v560 = vstv %s559
        %v561 = vmul.f32 %v560, %v555
        %v562 = vmul.f32 %v560, %v556
        %v563 = vmul.f32 %v560, %v557
        %v564 = vmul.f32 %v560, %v558
        %v569 = vrot.slane %v561, 1
        %v570 = vrot.slane %v563, 1
        %v571 = vsel %vm155, %v569, %v570
        %v572 = vrot.slane %v562, 1
        %v573 = vrot.slane %v564, 1
        %v574 = vsel %vm155, %v572, %v573
        %v577 = vadd.f32 %v547, %v571
        %v578 = vadd.f32 %v548, %v574
        %s579 = sld [smem:[#allocation3 + $0x28]]
        %v580 = vstv %s579
        %v581 = vmul.f32 %v580, %v555
        %v582 = vmul.f32 %v580, %v556
        %v583 = vmul.f32 %v580, %v557
        %v584 = vmul.f32 %v580, %v558
        %v589 = vrot.slane %v581, 1
        %v590 = vrot.slane %v583, 1
        %v591 = vsel %vm155, %v589, %v590
        %v592 = vrot.slane %v582, 1
        %v593 = vrot.slane %v584, 1
        %v594 = vsel %vm155, %v592, %v593
        %v597 = vadd.f32 %v553, %v591
        %v598 = vadd.f32 %v554, %v594
        %v599 = vld [vmem:[%s540] sm:$0xfc]
        %v600 = vld [vmem:[%s540 + $0x8] sm:$0xfc]
        %v601 = vld [vmem:[%s540 + $0x10] sm:$0x3]
        %v602 = vld [vmem:[%s540 + $0x18] sm:$0x3]
        %s603 = sld [smem:[#allocation3 + $0xe]]
        %v604 = vstv %s603
        %v605 = vmul.f32 %v604, %v599
        %v606 = vmul.f32 %v604, %v600
        %v607 = vmul.f32 %v604, %v601
        %v608 = vmul.f32 %v604, %v602
        %v613 = vrot.slane %v605, 2
        %v614 = vrot.slane %v607, 2
        %v615 = vsel %vm200, %v613, %v614
        %v616 = vrot.slane %v606, 2
        %v617 = vrot.slane %v608, 2
        %v618 = vsel %vm200, %v616, %v617
        %v621 = vadd.f32 %v577, %v615
        %v622 = vadd.f32 %v578, %v618
        %s623 = sld [smem:[#allocation3 + $0x29]]
        %v624 = vstv %s623
        %v625 = vmul.f32 %v624, %v599
        %v626 = vmul.f32 %v624, %v600
        %v627 = vmul.f32 %v624, %v601
        %v628 = vmul.f32 %v624, %v602
        %v633 = vrot.slane %v625, 2
        %v634 = vrot.slane %v627, 2
        %v635 = vsel %vm200, %v633, %v634
        %v636 = vrot.slane %v626, 2
        %v637 = vrot.slane %v628, 2
        %v638 = vsel %vm200, %v636, %v637
        %v641 = vadd.f32 %v597, %v635
        %v642 = vadd.f32 %v598, %v638
        %s643 = scalar_lea.vmem %s126, 160
        %v644 = vld [vmem:[%s643] sm:$0xff]
        %v645 = vld [vmem:[%s643 + $0x8] sm:$0xff]
        %s646 = sld [smem:[#allocation3 + $0xf]]
        %v647 = vstv %s646
        %v648 = vmul.f32 %v647, %v644
        %v649 = vmul.f32 %v647, %v645
        %v650 = vadd.f32 %v621, %v648
        %v651 = vadd.f32 %v622, %v649
        %s652 = sld [smem:[#allocation3 + $0x2a]]
        %v653 = vstv %s652
        %v654 = vmul.f32 %v653, %v644
        %v655 = vmul.f32 %v653, %v645
        %v656 = vadd.f32 %v641, %v654
        %v657 = vadd.f32 %v642, %v655
        %v658 = vld [vmem:[%s643] sm:$0xfe]
        %v659 = vld [vmem:[%s643 + $0x8] sm:$0xfe]
        %v660 = vld [vmem:[%s643 + $0x10] sm:$0x1]
        %v661 = vld [vmem:[%s643 + $0x18] sm:$0x1]
        %s662 = sld [smem:[#allocation3 + $0x10]]
        %v663 = vstv %s662
        %v664 = vmul.f32 %v663, %v658
        %v665 = vmul.f32 %v663, %v659
        %v666 = vmul.f32 %v663, %v660
        %v667 = vmul.f32 %v663, %v661
        %v672 = vrot.slane %v664, 1
        %v673 = vrot.slane %v666, 1
        %v674 = vsel %vm155, %v672, %v673
        %v675 = vrot.slane %v665, 1
        %v676 = vrot.slane %v667, 1
        %v677 = vsel %vm155, %v675, %v676
        %v680 = vadd.f32 %v650, %v674
        %v681 = vadd.f32 %v651, %v677
        %s682 = sld [smem:[#allocation3 + $0x2b]]
        %v683 = vstv %s682
        %v684 = vmul.f32 %v683, %v658
        %v685 = vmul.f32 %v683, %v659
        %v686 = vmul.f32 %v683, %v660
        %v687 = vmul.f32 %v683, %v661
        %v692 = vrot.slane %v684, 1
        %v693 = vrot.slane %v686, 1
        %v694 = vsel %vm155, %v692, %v693
        %v695 = vrot.slane %v685, 1
        %v696 = vrot.slane %v687, 1
        %v697 = vsel %vm155, %v695, %v696
        %v700 = vadd.f32 %v656, %v694
        %v701 = vadd.f32 %v657, %v697
        %v702 = vld [vmem:[%s643] sm:$0xfc]
        %v703 = vld [vmem:[%s643 + $0x8] sm:$0xfc]
        %v704 = vld [vmem:[%s643 + $0x10] sm:$0x3]
        %v705 = vld [vmem:[%s643 + $0x18] sm:$0x3]
        %s706 = sld [smem:[#allocation3 + $0x11]]
        %v707 = vstv %s706
        %v708 = vmul.f32 %v707, %v702
        %v709 = vmul.f32 %v707, %v703
        %v710 = vmul.f32 %v707, %v704
        %v711 = vmul.f32 %v707, %v705
        %v716 = vrot.slane %v708, 2
        %v717 = vrot.slane %v710, 2
        %v718 = vsel %vm200, %v716, %v717
        %v719 = vrot.slane %v709, 2
        %v720 = vrot.slane %v711, 2
        %v721 = vsel %vm200, %v719, %v720
        %v724 = vadd.f32 %v680, %v718
        %v725 = vadd.f32 %v681, %v721
        %s726 = sld [smem:[#allocation3 + $0x2c]]
        %v727 = vstv %s726
        %v728 = vmul.f32 %v727, %v702
        %v729 = vmul.f32 %v727, %v703
        %v730 = vmul.f32 %v727, %v704
        %v731 = vmul.f32 %v727, %v705
        %v736 = vrot.slane %v728, 2
        %v737 = vrot.slane %v730, 2
        %v738 = vsel %vm200, %v736, %v737
        %v739 = vrot.slane %v729, 2
        %v740 = vrot.slane %v731, 2
        %v741 = vsel %vm200, %v739, %v740
        %v744 = vadd.f32 %v700, %v738
        %v745 = vadd.f32 %v701, %v741
        %s746 = scalar_lea.vmem %s126, 192
        %v747 = vld [vmem:[%s746] sm:$0xff]
        %v748 = vld [vmem:[%s746 + $0x8] sm:$0xff]
        %s749 = sld [smem:[#allocation3 + $0x12]]
        %v750 = vstv %s749
        %v751 = vmul.f32 %v750, %v747
        %v752 = vmul.f32 %v750, %v748
        %v753 = vadd.f32 %v724, %v751
        %v754 = vadd.f32 %v725, %v752
        %s755 = sld [smem:[#allocation3 + $0x2d]]
        %v756 = vstv %s755
        %v757 = vmul.f32 %v756, %v747
        %v758 = vmul.f32 %v756, %v748
        %v759 = vadd.f32 %v744, %v757
        %v760 = vadd.f32 %v745, %v758
        %v761 = vld [vmem:[%s746] sm:$0xfe]
        %v762 = vld [vmem:[%s746 + $0x8] sm:$0xfe]
        %v763 = vld [vmem:[%s746 + $0x10] sm:$0x1]
        %v764 = vld [vmem:[%s746 + $0x18] sm:$0x1]
        %s765 = sld [smem:[#allocation3 + $0x13]]
        %v766 = vstv %s765
        %v767 = vmul.f32 %v766, %v761
        %v768 = vmul.f32 %v766, %v762
        %v769 = vmul.f32 %v766, %v763
        %v770 = vmul.f32 %v766, %v764
        %v775 = vrot.slane %v767, 1
        %v776 = vrot.slane %v769, 1
        %v777 = vsel %vm155, %v775, %v776
        %v778 = vrot.slane %v768, 1
        %v779 = vrot.slane %v770, 1
        %v780 = vsel %vm155, %v778, %v779
        %v783 = vadd.f32 %v753, %v777
        %v784 = vadd.f32 %v754, %v780
        %s785 = sld [smem:[#allocation3 + $0x2e]]
        %v786 = vstv %s785
        %v787 = vmul.f32 %v786, %v761
        %v788 = vmul.f32 %v786, %v762
        %v789 = vmul.f32 %v786, %v763
        %v790 = vmul.f32 %v786, %v764
        %v795 = vrot.slane %v787, 1
        %v796 = vrot.slane %v789, 1
        %v797 = vsel %vm155, %v795, %v796
        %v798 = vrot.slane %v788, 1
        %v799 = vrot.slane %v790, 1
        %v800 = vsel %vm155, %v798, %v799
        %v803 = vadd.f32 %v759, %v797
        %v804 = vadd.f32 %v760, %v800
        %v805 = vld [vmem:[%s746] sm:$0xfc]
        %v806 = vld [vmem:[%s746 + $0x8] sm:$0xfc]
        %v807 = vld [vmem:[%s746 + $0x10] sm:$0x3]
        %v808 = vld [vmem:[%s746 + $0x18] sm:$0x3]
        %s809 = sld [smem:[#allocation3 + $0x14]]
        %v810 = vstv %s809
        %v811 = vmul.f32 %v810, %v805
        %v812 = vmul.f32 %v810, %v806
        %v813 = vmul.f32 %v810, %v807
        %v814 = vmul.f32 %v810, %v808
        %v819 = vrot.slane %v811, 2
        %v820 = vrot.slane %v813, 2
        %v821 = vsel %vm200, %v819, %v820
        %v822 = vrot.slane %v812, 2
        %v823 = vrot.slane %v814, 2
        %v824 = vsel %vm200, %v822, %v823
        %v827 = vadd.f32 %v783, %v821
        %v828 = vadd.f32 %v784, %v824
        %s829 = sld [smem:[#allocation3 + $0x2f]]
        %v830 = vstv %s829
        %v831 = vmul.f32 %v830, %v805
        %v832 = vmul.f32 %v830, %v806
        %v833 = vmul.f32 %v830, %v807
        %v834 = vmul.f32 %v830, %v808
        %v839 = vrot.slane %v831, 2
        %v840 = vrot.slane %v833, 2
        %v841 = vsel %vm200, %v839, %v840
        %v842 = vrot.slane %v832, 2
        %v843 = vrot.slane %v834, 2
        %v844 = vsel %vm200, %v842, %v843
        %v847 = vadd.f32 %v803, %v841
        %v848 = vadd.f32 %v804, %v844
        %s849 = scalar_lea.vmem %s126, 224
        %v850 = vld [vmem:[%s849] sm:$0xff]
        %v851 = vld [vmem:[%s849 + $0x8] sm:$0xff]
        %s852 = sld [smem:[#allocation3 + $0x15]]
        %v853 = vstv %s852
        %v854 = vmul.f32 %v853, %v850
        %v855 = vmul.f32 %v853, %v851
        %v856 = vadd.f32 %v827, %v854
        %v857 = vadd.f32 %v828, %v855
        %s858 = sld [smem:[#allocation3 + $0x30]]
        %v859 = vstv %s858
        %v860 = vmul.f32 %v859, %v850
        %v861 = vmul.f32 %v859, %v851
        %v862 = vadd.f32 %v847, %v860
        %v863 = vadd.f32 %v848, %v861
        %v864 = vld [vmem:[%s849] sm:$0xfe]
        %v865 = vld [vmem:[%s849 + $0x8] sm:$0xfe]
        %v866 = vld [vmem:[%s849 + $0x10] sm:$0x1]
        %v867 = vld [vmem:[%s849 + $0x18] sm:$0x1]
        %s868 = sld [smem:[#allocation3 + $0x16]]
        %v869 = vstv %s868
        %v870 = vmul.f32 %v869, %v864
        %v871 = vmul.f32 %v869, %v865
        %v872 = vmul.f32 %v869, %v866
        %v873 = vmul.f32 %v869, %v867
        %v878 = vrot.slane %v870, 1
        %v879 = vrot.slane %v872, 1
        %v880 = vsel %vm155, %v878, %v879
        %v881 = vrot.slane %v871, 1
        %v882 = vrot.slane %v873, 1
        %v883 = vsel %vm155, %v881, %v882
        %v886 = vadd.f32 %v856, %v880
        %v887 = vadd.f32 %v857, %v883
        %s888 = sld [smem:[#allocation3 + $0x31]]
        %v889 = vstv %s888
        %v890 = vmul.f32 %v889, %v864
        %v891 = vmul.f32 %v889, %v865
        %v892 = vmul.f32 %v889, %v866
        %v893 = vmul.f32 %v889, %v867
        %v898 = vrot.slane %v890, 1
        %v899 = vrot.slane %v892, 1
        %v900 = vsel %vm155, %v898, %v899
        %v901 = vrot.slane %v891, 1
        %v902 = vrot.slane %v893, 1
        %v903 = vsel %vm155, %v901, %v902
        %v906 = vadd.f32 %v862, %v900
        %v907 = vadd.f32 %v863, %v903
        %v908 = vld [vmem:[%s849] sm:$0xfc]
        %v909 = vld [vmem:[%s849 + $0x8] sm:$0xfc]
        %v910 = vld [vmem:[%s849 + $0x10] sm:$0x3]
        %v911 = vld [vmem:[%s849 + $0x18] sm:$0x3]
        %s912 = sld [smem:[#allocation3 + $0x17]]
        %v913 = vstv %s912
        %v914 = vmul.f32 %v913, %v908
        %v915 = vmul.f32 %v913, %v909
        %v916 = vmul.f32 %v913, %v910
        %v917 = vmul.f32 %v913, %v911
        %v922 = vrot.slane %v914, 2
        %v923 = vrot.slane %v916, 2
        %v924 = vsel %vm200, %v922, %v923
        %v925 = vrot.slane %v915, 2
        %v926 = vrot.slane %v917, 2
        %v927 = vsel %vm200, %v925, %v926
        %v930 = vadd.f32 %v886, %v924
        %v931 = vadd.f32 %v887, %v927
        %s932 = sld [smem:[#allocation3 + $0x32]]
        %v933 = vstv %s932
        %v934 = vmul.f32 %v933, %v908
        %v935 = vmul.f32 %v933, %v909
        %v936 = vmul.f32 %v933, %v910
        %v937 = vmul.f32 %v933, %v911
        %v942 = vrot.slane %v934, 2
        %v943 = vrot.slane %v936, 2
        %v944 = vsel %vm200, %v942, %v943
        %v945 = vrot.slane %v935, 2
        %v946 = vrot.slane %v937, 2
        %v947 = vsel %vm200, %v945, %v946
        %v950 = vadd.f32 %v906, %v944
        %v951 = vadd.f32 %v907, %v947
        %s952 = scalar_lea.vmem %s126, 256
        %v953 = vld [vmem:[%s952] sm:$0xff]
        %v954 = vld [vmem:[%s952 + $0x8] sm:$0xff]
        %s955 = sld [smem:[#allocation3 + $0x18]]
        %v956 = vstv %s955
        %v957 = vmul.f32 %v956, %v953
        %v958 = vmul.f32 %v956, %v954
        %v959 = vadd.f32 %v930, %v957
        %v960 = vadd.f32 %v931, %v958
        %s961 = sld [smem:[#allocation3 + $0x33]]
        %v962 = vstv %s961
        %v963 = vmul.f32 %v962, %v953
        %v964 = vmul.f32 %v962, %v954
        %v965 = vadd.f32 %v950, %v963
        %v966 = vadd.f32 %v951, %v964
        %v967 = vld [vmem:[%s952] sm:$0xfe]
        %v968 = vld [vmem:[%s952 + $0x8] sm:$0xfe]
        %v969 = vld [vmem:[%s952 + $0x10] sm:$0x1]
        %v970 = vld [vmem:[%s952 + $0x18] sm:$0x1]
        %s971 = sld [smem:[#allocation3 + $0x19]]
        %v972 = vstv %s971
        %v973 = vmul.f32 %v972, %v967
        %v974 = vmul.f32 %v972, %v968
        %v975 = vmul.f32 %v972, %v969
        %v976 = vmul.f32 %v972, %v970
        %v981 = vrot.slane %v973, 1
        %v982 = vrot.slane %v975, 1
        %v983 = vsel %vm155, %v981, %v982
        %v984 = vrot.slane %v974, 1
        %v985 = vrot.slane %v976, 1
        %v986 = vsel %vm155, %v984, %v985
        %v989 = vadd.f32 %v959, %v983
        %v990 = vadd.f32 %v960, %v986
        %s991 = sld [smem:[#allocation3 + $0x34]]
        %v992 = vstv %s991
        %v993 = vmul.f32 %v992, %v967
        %v994 = vmul.f32 %v992, %v968
        %v995 = vmul.f32 %v992, %v969
        %v996 = vmul.f32 %v992, %v970
        %v1001 = vrot.slane %v993, 1
        %v1002 = vrot.slane %v995, 1
        %v1003 = vsel %vm155, %v1001, %v1002
        %v1004 = vrot.slane %v994, 1
        %v1005 = vrot.slane %v996, 1
        %v1006 = vsel %vm155, %v1004, %v1005
        %v1009 = vadd.f32 %v965, %v1003
        %v1010 = vadd.f32 %v966, %v1006
        %v1011 = vld [vmem:[%s952] sm:$0xfc]
        %v1012 = vld [vmem:[%s952 + $0x8] sm:$0xfc]
        %v1013 = vld [vmem:[%s952 + $0x10] sm:$0x3]
        %v1014 = vld [vmem:[%s952 + $0x18] sm:$0x3]
        %s1015 = sld [smem:[#allocation3 + $0x1a]]
        %v1016 = vstv %s1015
        %v1017 = vmul.f32 %v1016, %v1011
        %v1018 = vmul.f32 %v1016, %v1012
        %v1019 = vmul.f32 %v1016, %v1013
        %v1020 = vmul.f32 %v1016, %v1014
        %v1025 = vrot.slane %v1017, 2
        %v1026 = vrot.slane %v1019, 2
        %v1027 = vsel %vm200, %v1025, %v1026
        %v1028 = vrot.slane %v1018, 2
        %v1029 = vrot.slane %v1020, 2
        %v1030 = vsel %vm200, %v1028, %v1029
        %v1033 = vadd.f32 %v989, %v1027
        %v1034 = vadd.f32 %v990, %v1030
        %s1035 = sld [smem:[#allocation3 + $0x35]]
        %v1036 = vstv %s1035
        %v1037 = vmul.f32 %v1036, %v1011
        %v1038 = vmul.f32 %v1036, %v1012
        %v1039 = vmul.f32 %v1036, %v1013
        %v1040 = vmul.f32 %v1036, %v1014
        %v1045 = vrot.slane %v1037, 2
        %v1046 = vrot.slane %v1039, 2
        %v1047 = vsel %vm200, %v1045, %v1046
        %v1048 = vrot.slane %v1038, 2
        %v1049 = vrot.slane %v1040, 2
        %v1050 = vsel %vm200, %v1048, %v1049
        %v1053 = vadd.f32 %v1009, %v1047
        %v1054 = vadd.f32 %v1010, %v1050
        %v1055 = vtanh.pop %v1033
        %v1056 = vtanh.pop %v1034
        %v1057 = vmax.f32 %v1055, 0.0
        %v1058 = vmax.f32 %v1056, 0.0
        %1059 = vst [vmem:[%s121] sm:$0xff] %v1057
        %1060 = vst [vmem:[%s121 + $0x8] sm:$0xff] %v1058
        %v1061 = vtanh.pop %v1053
        %v1062 = vtanh.pop %v1054
        %v1063 = vmax.f32 %v1061, 0.0
        %v1064 = vmax.f32 %v1062, 0.0
        %s1065 = scalar_lea.vmem %s121, 16 [#allocation5]
        %1066 = vst [vmem:[%s1065] sm:$0xff] %v1063
        %1067 = vst [vmem:[%s1065 + $0x8] sm:$0xff] %v1064
        %s1068 = sand.u32 %s61, 1
        %s1069 = scalar_lea.sflag [#allocation6], %s1068
        %s1070 = sand.u32 %s61, 1
        %s1071 = smul.addr %s1070, 32
        %s1072 = scalar_lea.vmem [#allocation5], %s1071
        // Predicated region
        $region25: #{tpu_custom_call.1} parent=23 // pred_check
          %p1073 = pneg %p71
        $region26: #{tpu_custom_call.1} parent=23 // pred_check_branch
          %1075 = sbr.rel (%p1073) target = $region28
        $region27: #{tpu_custom_call.1} parent=23 // pred_region
          %s1077 = ssub.s32 512, 512
          %1078 = vsyncadd %s1069, %s1077
          %s1079 = smul.addr %s27, 4
          %s1080 = smul.addr %s1079, 128
          %s1081 = scalar_lea.hbm %s3, %s1080
          %s1082 = sshll.u32 %s1072, 4
          %s1083 = int_to_ptr.vmem [resolvable:$true] %s1082
          %1088 = dma.vmem_to_hbm [thread:$0]  %s1083, 512, %s1081, %s1069, 256, 256, 16
        $region28: #{tpu_custom_call.1} parent=23 // pred_fallthru
          _
      $region24: #{tpu_custom_call.1} parent=5 // pred_fallthru
        _
      %p1089 = scmp.le.s32.totalorder 2, %s22
      // Predicated region
      $region29: #{tpu_custom_call.1} parent=5 // pred_check
        %p1090 = pneg %p1089
      $region30: #{tpu_custom_call.1} parent=5 // pred_check_branch
        %1092 = sbr.rel (%p1090) target = $region32
      $region31: #{tpu_custom_call.1} parent=5 // pred_region
        %s1093 = ssub.s32 %s22, 2
        // Predicated region
        $region33: #{tpu_custom_call.1} parent=31 // pred_check
          %p1094 = pneg %p77
        $region34: #{tpu_custom_call.1} parent=31 // pred_check_branch
          %1096 = sbr.rel (%p1094) target = $region36
        $region35: #{tpu_custom_call.1} parent=31 // pred_region
          %s1097 = sand.u32 %s62, 1
          %s1098 = scalar_lea.sflag [#allocation6], %s1097
          %s1099 = sand.u32 %s62, 1
          %s1100 = smul.addr %s1099, 32
          %s1101 = scalar_lea.vmem [#allocation5], %s1100
          %1102 = dma.done %s1098, 512
        $region36: #{tpu_custom_call.1} parent=31 // pred_fallthru
          _
      $region32: #{tpu_custom_call.1} parent=5 // pred_fallthru
        _
    $region6: #{tpu_custom_call.1} parent=1 // loop_footer
      %s26 = sadd.s32 1, %s22
    $region7: #{tpu_custom_call.1} parent=1 // loop_footer_branch
      %21 = sbr.rel target = $region3
    $region8: #{tpu_custom_call.1} parent=1 // loop_exit
      _
    %1103 = vsyncpa [#allocation6], 1
    %s1104 = scalar_lea.sflag [#allocation6], 1
    %1105 = vsyncpa %s1104, 1

</llo_original>
